<compile_context>
chip_gen: v5e
topology: v5e:2x2
jax: 0.10.0
libtpu: 0.0.40
codegen_flags: <defaults>
</compile_context>

<pallas_src>
import functools

import jax
import jax.numpy as jnp
from jax.experimental import pallas as pl
from jax.experimental.pallas import tpu as pltpu


# ------------------------------ Pallas kernel -------------------------------


def _temporal_block_kernel(x_ref, w1_ref, b1_ref, w2_ref, b2_ref, *rest,
                           K, dilation, pad, LT, has_downsample):
    """Fused TemporalBlock for one (batch n, L-tile j) grid step.

    x_ref  : (1, C_in, LT)        current input tile (NCL layout)
    w1_ref : (C_mid, K*C_in)      conv1 weights, taps folded
    b1_ref : (C_mid, 1)
    w2_ref : (C_out, K*C_mid)     conv2 weights, taps folded
    b2_ref : (C_out, 1)
    [wd_ref: (C_out, C_in), bd_ref: (C_out, 1)]   only if has_downsample
    out_ref: (1, C_out, LT)
    xw_ref : (C_in, pad+LT)  VMEM scratch: [left causal halo | current x tile]
    hw_ref : (C_mid, pad+LT) VMEM scratch: [left causal halo | conv1 output]
    The halos are carried across sequential L-tiles of the same batch element.
    """
    if has_downsample:
        wd_ref, bd_ref, out_ref, xw_ref, hw_ref = rest
    else:
        out_ref, xw_ref, hw_ref = rest

    d = dilation
    j = pl.program_id(1)
    x_tile = x_ref[0]                                  # (C_in, LT)

    if pad > 0:
        @pl.when(j == 0)
        def _zero_halo():                              # causal left boundary
            xw_ref[:, :pad] = jnp.zeros((xw_ref.shape[0], pad), xw_ref.dtype)
            hw_ref[:, :pad] = jnp.zeros((hw_ref.shape[0], pad), hw_ref.dtype)

        @pl.when(j > 0)
        def _carry_halo():                             # tail of previous tile
            xw_ref[:, :pad] = xw_ref[:, LT:LT + pad]
            hw_ref[:, :pad] = hw_ref[:, LT:LT + pad]

    xw_ref[:, pad:pad + LT] = x_tile

    # --- conv1 (dilated, causal) + ReLU; dropout1 = identity at inference ----
    xw = xw_ref[...]                                   # (C_in, pad+LT)
    rhs1 = jnp.concatenate([xw[:, k * d:k * d + LT] for k in range(K)], axis=0)
    h = jnp.dot(w1_ref[...], rhs1, preferred_element_type=jnp.float32)
    h = jnp.maximum(h + b1_ref[...], 0.0)              # (C_mid, LT), f32
    hw_ref[:, pad:pad + LT] = h.astype(hw_ref.dtype)

    # --- conv2 (dilated, causal) + ReLU; dropout2 = identity ------------------
    hwv = hw_ref[...]                                  # (C_mid, pad+LT)
    rhs2 = jnp.concatenate([hwv[:, k * d:k * d + LT] for k in range(K)], axis=0)
    out2 = jnp.dot(w2_ref[...], rhs2, preferred_element_type=jnp.float32)
    out2 = jnp.maximum(out2 + b2_ref[...], 0.0)        # (C_out, LT), f32

    # --- residual (1x1 downsample or identity) + final ReLU -------------------
    if has_downsample:
        res = jnp.dot(wd_ref[...], x_tile, preferred_element_type=jnp.float32)
        res = res + bd_ref[...]
    else:
        res = x_tile.astype(jnp.float32)               # free VPU add

    out_ref[0] = jnp.maximum(out2 + res, 0.0).astype(out_ref.dtype)


# ------------------------------ JAX wrapper ----------------------------------


def temporal_block_forward(x_ncl, params, *, dilation, padding,
                           l_tile=512, compute_dtype=None):
    """TemporalBlock.forward. x_ncl: (N, C_in, L) -> (N, C_out, L), NCL layout."""
    N, C_in, L = x_ncl.shape
    w1 = params["w1"]                                  # torch layout (C_mid, C_in, K)
    C_mid, _, K = w1.shape
    w2 = params["w2"]                                  # (C_out, C_mid, K)
    C_out = w2.shape[0]
    pad = padding
    # The residual add in the module only type-checks for the causal setting.
    assert pad == dilation * (K - 1), \
        "TemporalBlock requires padding == dilation * (kernel_size - 1)"

    cdt = x_ncl.dtype if compute_dtype is None else compute_dtype
    out_dtype = x_ncl.dtype

    # Fold the K dilation taps into one contraction axis (tap-major ordering
    # matching the kernel's rhs assembly): (C_out, C_in, K) -> (C_out, K*C_in).
    w1_flat = jnp.transpose(w1, (0, 2, 1)).reshape(C_mid, K * C_in).astype(cdt)
    w2_flat = jnp.transpose(w2, (0, 2, 1)).reshape(C_out, K * C_mid).astype(cdt)
    b1 = params["b1"].reshape(C_mid, 1).astype(jnp.float32)
    b2 = params["b2"].reshape(C_out, 1).astype(jnp.float32)

    has_downsample = params.get("wd") is not None

    # L tiling (lane axis): single full-L tile for short sequences, otherwise
    # 128-multiple tiles (lane-dense, unmasked stores) sized well under the
    # v7x 64 MiB VMEM budget.
    if L <= l_tile:
        LT, Lp = L, L
    else:
        assert l_tile % 128 == 0, "l_tile must be a multiple of 128"
        LT = l_tile
        Lp = -(-L // LT) * LT
    n_lt = Lp // LT

    xp = x_ncl.astype(cdt)
    if Lp != L:
        xp = jnp.pad(xp, ((0, 0), (0, 0), (0, Lp - L)))   # right-only, causal-safe

    in_specs = [
        pl.BlockSpec((1, C_in, LT), lambda n, j: (n, 0, j)),
        pl.BlockSpec((C_mid, K * C_in), lambda n, j: (0, 0)),
        pl.BlockSpec((C_mid, 1), lambda n, j: (0, 0)),
        pl.BlockSpec((C_out, K * C_mid), lambda n, j: (0, 0)),
        pl.BlockSpec((C_out, 1), lambda n, j: (0, 0)),
    ]
    args = [xp, w1_flat, b1, w2_flat, b2]
    if has_downsample:
        wd = params["wd"][:, :, 0].astype(cdt)             # (C_out, C_in)
        bd = params["bd"].reshape(C_out, 1).astype(jnp.float32)
        in_specs += [pl.BlockSpec((C_out, C_in), lambda n, j: (0, 0)),
                     pl.BlockSpec((C_out, 1), lambda n, j: (0, 0))]
        args += [wd, bd]

    kernel = functools.partial(_temporal_block_kernel, K=K, dilation=dilation,
                               pad=pad, LT=LT, has_downsample=has_downsample)

    out = pl.pallas_call(
        kernel,
        out_shape=jax.ShapeDtypeStruct((N, C_out, Lp), out_dtype),
        grid=(N, n_lt),
        in_specs=in_specs,
        out_specs=pl.BlockSpec((1, C_out, LT), lambda n, j: (n, 0, j)),
        scratch_shapes=[
            pltpu.VMEM((C_in, pad + LT), cdt),   # x tile + carried causal halo
            pltpu.VMEM((C_mid, pad + LT), cdt),  # conv1 output + carried halo
        ],
        compiler_params=pltpu.CompilerParams(
            dimension_semantics=("parallel", "arbitrary"),
            vmem_limit_bytes=48 * 1024 * 1024,   # explicit budget, fits v7x VMEM
        ),
    )(*args)

    return out if Lp == L else out[:, :, :L]


# ---------------------------- parameter set-up -------------------------------


def _weight_norm_effective(key, c_out, c_in, k):
    """Effective weight of torch weight_norm: g * v / ||v|| (norm over (C_in, K))."""
    v = 0.01 * jax.random.normal(key, (c_out, c_in, k), dtype=jnp.float32)
    g = jnp.ones((c_out,), dtype=jnp.float32)
    norm = jnp.sqrt(jnp.sum(v * v, axis=(1, 2), keepdims=True)) + 1e-12
    return g[:, None, None] * v / norm


def make_params(key, n_inputs, n_outputs, kernel_size):
    keys = jax.random.split(key, 6)
    params = {
        "w1": _weight_norm_effective(keys[0], n_outputs, n_inputs, kernel_size),
        "b1": 0.01 * jax.random.normal(keys[1], (n_outputs,), dtype=jnp.float32),
        "w2": _weight_norm_effective(keys[2], n_outputs, n_outputs, kernel_size),
        "b2": 0.01 * jax.random.normal(keys[3], (n_outputs,), dtype=jnp.float32),
    }
    if n_inputs != n_outputs:
        params["wd"] = 0.01 * jax.random.normal(
            keys[4], (n_outputs, n_inputs, 1), dtype=jnp.float32)
        params["bd"] = 0.01 * jax.random.normal(
            keys[5], (n_outputs,), dtype=jnp.float32)
    else:
        params["wd"] = None
        params["bd"] = None
    return params


# ------------------------------- pure-JAX ref ---------------------------------


def _ref_conv1d(x_ncl, w_oik, b, padding, dilation):
    out = jax.lax.conv_general_dilated(
        x_ncl, w_oik, window_strides=(1,), padding=[(padding, padding)],
        rhs_dilation=(dilation,), dimension_numbers=("NCH", "OIH", "NCH"),
    )
    return out + b[None, :, None]


def ref_forward(x_ncl, params, *, dilation, padding):
    o = _ref_conv1d(x_ncl, params["w1"], params["b1"], padding, dilation)
    o = jnp.maximum(o[:, :, :-padding], 0.0)
    o = _ref_conv1d(o, params["w2"], params["b2"], padding, dilation)
    o = jnp.maximum(o[:, :, :-padding], 0.0)
    if params["wd"] is not None:
        res = _ref_conv1d(x_ncl, params["wd"], params["bd"], 0, 1)
    else:
        res = x_ncl
    return jnp.maximum(o + res, 0.0)


# ----------------------------------- main -------------------------------------

if __name__ == "__main__":
    key = jax.random.PRNGKey(0)
    k_x, k_p, k_x2, k_p2 = jax.random.split(key, 4)

    K, DIL = 3, 2
    PAD = (K - 1) * DIL

    # --- config 1: downsample residual (n_in != n_out), single L-tile, f32 ----
    N, C_IN, C_OUT, L = 2, 4, 8, 16
    x = jax.random.normal(k_x, (N, C_IN, L), dtype=jnp.float32)     # NCL input
    params = make_params(k_p, C_IN, C_OUT, K)

    y = jax.block_until_ready(
        temporal_block_forward(x, params, dilation=DIL, padding=PAD))
    y_ref = ref_forward(x, params, dilation=DIL, padding=PAD)
    assert y.shape == (N, C_OUT, L), y.shape
    assert jnp.allclose(y, y_ref, rtol=1e-5, atol=1e-5), \
        float(jnp.max(jnp.abs(y - y_ref)))

    # bf16 activations/weights, f32 accumulation (memory-bound win on v6e/v7x).
    y_bf16 = jax.block_until_ready(
        temporal_block_forward(x, params, dilation=DIL, padding=PAD,
                               compute_dtype=jnp.bfloat16))
    assert jnp.allclose(y_bf16.astype(jnp.float32), y_ref, rtol=5e-2, atol=5e-3), \
        float(jnp.max(jnp.abs(y_bf16.astype(jnp.float32) - y_ref)))

    # --- config 2: identity residual, multi L-tile with carried causal halo,
    #     L not a multiple of the tile (exercises right-pad + final slice) -----
    N2, C2, L2 = 2, 8, 200
    x2 = jax.random.normal(k_x2, (N2, C2, L2), dtype=jnp.float32)
    params2 = make_params(k_p2, C2, C2, K)
    y2 = jax.block_until_ready(
        temporal_block_forward(x2, params2, dilation=DIL, padding=PAD, l_tile=128))
    y2_ref = ref_forward(x2, params2, dilation=DIL, padding=PAD)
    assert y2.shape == (N2, C2, L2), y2.shape
    assert jnp.allclose(y2, y2_ref, rtol=1e-5, atol=1e-5), \
        float(jnp.max(jnp.abs(y2 - y2_ref)))

    print("KERNEL_OK")
</pallas_src>

<mosaic_0001>
module attributes {stable_mosaic.version = 11 : i64} {
  func.func @_temporal_block_kernel(%arg0: i32, %arg1: i32, %arg2: memref<1x4x16xf32, #tpu.memory_space<vmem>>, %arg3: memref<8x12xf32, #tpu.memory_space<vmem>>, %arg4: memref<8x1xf32, #tpu.memory_space<vmem>>, %arg5: memref<8x24xf32, #tpu.memory_space<vmem>>, %arg6: memref<8x1xf32, #tpu.memory_space<vmem>>, %arg7: memref<8x4xf32, #tpu.memory_space<vmem>>, %arg8: memref<8x1xf32, #tpu.memory_space<vmem>>, %arg9: memref<1x8x16xf32, #tpu.memory_space<vmem>>, %arg10: memref<4x20xf32, #tpu.memory_space<vmem>>, %arg11: memref<8x20xf32, #tpu.memory_space<vmem>>) attributes {dimension_semantics = [#tpu.dimension_semantics<parallel>, #tpu.dimension_semantics<arbitrary>], iteration_bounds = array<i64: 2, 1>, scalar_prefetch = 0 : i64, scratch_operands = 2 : i64, tpu.core_type = #tpu.core_type<tc>, window_params = [{transform_indices = @transform_0, window_bounds = array<i64: 1, 4, 16>}, {pipeline_mode = #tpu.pipeline_mode<synchronous>, transform_indices = @transform_1, window_bounds = array<i64: 8, 12>}, {pipeline_mode = #tpu.pipeline_mode<synchronous>, transform_indices = @transform_2, window_bounds = array<i64: 8, 1>}, {pipeline_mode = #tpu.pipeline_mode<synchronous>, transform_indices = @transform_3, window_bounds = array<i64: 8, 24>}, {pipeline_mode = #tpu.pipeline_mode<synchronous>, transform_indices = @transform_4, window_bounds = array<i64: 8, 1>}, {pipeline_mode = #tpu.pipeline_mode<synchronous>, transform_indices = @transform_5, window_bounds = array<i64: 8, 4>}, {pipeline_mode = #tpu.pipeline_mode<synchronous>, transform_indices = @transform_6, window_bounds = array<i64: 8, 1>}, {transform_indices = @transform_7, window_bounds = array<i64: 1, 8, 16>}]} {
    %c0 = arith.constant 0 : index
    %c0_0 = arith.constant 0 : index
    %c0_1 = arith.constant 0 : index
    %0 = vector.load %arg2[%c0, %c0_0, %c0_1] : memref<1x4x16xf32, #tpu.memory_space<vmem>>, vector<1x4x16xf32>
    %1 = vector.shape_cast %0 : vector<1x4x16xf32> to vector<4x16xf32>
    %c0_i32 = arith.constant 0 : i32
    %2 = arith.cmpi eq, %arg1, %c0_i32 : i32
    %3 = arith.extui %2 : i1 to i32
    %c0_i32_2 = arith.constant 0 : i32
    %4 = arith.cmpi ne, %3, %c0_i32_2 : i32
    scf.if %4 {
      %cst_32 = arith.constant 0.000000e+00 : f32
      %45 = vector.broadcast %cst_32 : f32 to vector<4x4xf32>
      %c0_33 = arith.constant 0 : index
      %c0_34 = arith.constant 0 : index
      %46 = vector.load %arg10[%c0_33, %c0_34] : memref<4x20xf32, #tpu.memory_space<vmem>>, vector<4x4xf32>
      tpu.vector_store %arg10[%c0_33, %c0_34], %45 {strides = array<i32>} : memref<4x20xf32, #tpu.memory_space<vmem>>, vector<4x4xf32>,
      %cst_35 = arith.constant 0.000000e+00 : f32
      %47 = vector.broadcast %cst_35 : f32 to vector<8x4xf32>
      %c0_36 = arith.constant 0 : index
      %c0_37 = arith.constant 0 : index
      %48 = vector.load %arg11[%c0_36, %c0_37] : memref<8x20xf32, #tpu.memory_space<vmem>>, vector<8x4xf32>
      tpu.vector_store %arg11[%c0_36, %c0_37], %47 {strides = array<i32>} : memref<8x20xf32, #tpu.memory_space<vmem>>, vector<8x4xf32>,
    } else {
    }
    %c0_i32_3 = arith.constant 0 : i32
    %5 = arith.cmpi sgt, %arg1, %c0_i32_3 : i32
    %6 = arith.extui %5 : i1 to i32
    %c0_i32_4 = arith.constant 0 : i32
    %7 = arith.cmpi ne, %6, %c0_i32_4 : i32
    scf.if %7 {
      %c0_32 = arith.constant 0 : index
      %c16 = arith.constant 16 : index
      %45 = vector.load %arg10[%c0_32, %c16] : memref<4x20xf32, #tpu.memory_space<vmem>>, vector<4x4xf32>
      %c0_33 = arith.constant 0 : index
      %c0_34 = arith.constant 0 : index
      %46 = vector.load %arg10[%c0_33, %c0_34] : memref<4x20xf32, #tpu.memory_space<vmem>>, vector<4x4xf32>
      tpu.vector_store %arg10[%c0_33, %c0_34], %45 {strides = array<i32>} : memref<4x20xf32, #tpu.memory_space<vmem>>, vector<4x4xf32>,
      %c0_35 = arith.constant 0 : index
      %c16_36 = arith.constant 16 : index
      %47 = vector.load %arg11[%c0_35, %c16_36] : memref<8x20xf32, #tpu.memory_space<vmem>>, vector<8x4xf32>
      %c0_37 = arith.constant 0 : index
      %c0_38 = arith.constant 0 : index
      %48 = vector.load %arg11[%c0_37, %c0_38] : memref<8x20xf32, #tpu.memory_space<vmem>>, vector<8x4xf32>
      tpu.vector_store %arg11[%c0_37, %c0_38], %47 {strides = array<i32>} : memref<8x20xf32, #tpu.memory_space<vmem>>, vector<8x4xf32>,
    } else {
    }
    %c0_5 = arith.constant 0 : index
    %c4 = arith.constant 4 : index
    %8 = vector.load %arg10[%c0_5, %c4] : memref<4x20xf32, #tpu.memory_space<vmem>>, vector<4x16xf32>
    tpu.vector_store %arg10[%c0_5, %c4], %1 {strides = array<i32>} : memref<4x20xf32, #tpu.memory_space<vmem>>, vector<4x16xf32>,
    %c0_6 = arith.constant 0 : index
    %c0_7 = arith.constant 0 : index
    %9 = vector.load %arg10[%c0_6, %c0_7] : memref<4x20xf32, #tpu.memory_space<vmem>>, vector<4x20xf32>
    %10 = vector.extract_strided_slice %9 {offsets = [0, 0], sizes = [4, 16], strides = [1, 1]} : vector<4x20xf32> to vector<4x16xf32>
    %11 = vector.extract_strided_slice %9 {offsets = [0, 2], sizes = [4, 16], strides = [1, 1]} : vector<4x20xf32> to vector<4x16xf32>
    %12 = vector.extract_strided_slice %9 {offsets = [0, 4], sizes = [4, 16], strides = [1, 1]} : vector<4x20xf32> to vector<4x16xf32>
    %13 = tpu.concatenate %10, %11, %12 in 0 : vector<4x16xf32>, vector<4x16xf32>, vector<4x16xf32> -> vector<12x16xf32>
    %c0_8 = arith.constant 0 : index
    %c0_9 = arith.constant 0 : index
    %14 = vector.load %arg3[%c0_8, %c0_9] : memref<8x12xf32, #tpu.memory_space<vmem>>, vector<8x12xf32>
    %cst = arith.constant dense<0.000000e+00> : vector<8x16xf32>
    %15 = tpu.matmul %14, %13, %cst {dimension_numbers = #tpu.dot_dimension_numbers<[1], [0], [0], [1], [0, 0, 1, 1], [], []>} : vector<8x12xf32>, vector<12x16xf32>, vector<8x16xf32> -> vector<8x16xf32>
    %c0_10 = arith.constant 0 : index
    %c0_11 = arith.constant 0 : index
    %16 = vector.load %arg4[%c0_10, %c0_11] : memref<8x1xf32, #tpu.memory_space<vmem>>, vector<8x1xf32>
    %17 = vector.broadcast %16 : vector<8x1xf32> to vector<8x16xf32>
    %18 = arith.addf %15, %17 : vector<8x16xf32>
    %cst_12 = arith.constant 0.000000e+00 : f32
    %19 = vector.broadcast %cst_12 : f32 to vector<8x16xf32>
    %20 = arith.maximumf %18, %19 : vector<8x16xf32>
    %c0_13 = arith.constant 0 : index
    %c4_14 = arith.constant 4 : index
    %21 = vector.load %arg11[%c0_13, %c4_14] : memref<8x20xf32, #tpu.memory_space<vmem>>, vector<8x16xf32>
    tpu.vector_store %arg11[%c0_13, %c4_14], %20 {strides = array<i32>} : memref<8x20xf32, #tpu.memory_space<vmem>>, vector<8x16xf32>,
    %c0_15 = arith.constant 0 : index
    %c0_16 = arith.constant 0 : index
    %22 = vector.load %arg11[%c0_15, %c0_16] : memref<8x20xf32, #tpu.memory_space<vmem>>, vector<8x20xf32>
    %23 = vector.extract_strided_slice %22 {offsets = [0, 0], sizes = [8, 16], strides = [1, 1]} : vector<8x20xf32> to vector<8x16xf32>
    %24 = vector.extract_strided_slice %22 {offsets = [0, 2], sizes = [8, 16], strides = [1, 1]} : vector<8x20xf32> to vector<8x16xf32>
    %25 = vector.extract_strided_slice %22 {offsets = [0, 4], sizes = [8, 16], strides = [1, 1]} : vector<8x20xf32> to vector<8x16xf32>
    %26 = tpu.concatenate %23, %24, %25 in 0 : vector<8x16xf32>, vector<8x16xf32>, vector<8x16xf32> -> vector<24x16xf32>
    %c0_17 = arith.constant 0 : index
    %c0_18 = arith.constant 0 : index
    %27 = vector.load %arg5[%c0_17, %c0_18] : memref<8x24xf32, #tpu.memory_space<vmem>>, vector<8x24xf32>
    %cst_19 = arith.constant dense<0.000000e+00> : vector<8x16xf32>
    %28 = tpu.matmul %27, %26, %cst_19 {dimension_numbers = #tpu.dot_dimension_numbers<[1], [0], [0], [1], [0, 0, 1, 1], [], []>} : vector<8x24xf32>, vector<24x16xf32>, vector<8x16xf32> -> vector<8x16xf32>
    %c0_20 = arith.constant 0 : index
    %c0_21 = arith.constant 0 : index
    %29 = vector.load %arg6[%c0_20, %c0_21] : memref<8x1xf32, #tpu.memory_space<vmem>>, vector<8x1xf32>
    %30 = vector.broadcast %29 : vector<8x1xf32> to vector<8x16xf32>
    %31 = arith.addf %28, %30 : vector<8x16xf32>
    %cst_22 = arith.constant 0.000000e+00 : f32
    %32 = vector.broadcast %cst_22 : f32 to vector<8x16xf32>
    %33 = arith.maximumf %31, %32 : vector<8x16xf32>
    %c0_23 = arith.constant 0 : index
    %c0_24 = arith.constant 0 : index
    %34 = vector.load %arg7[%c0_23, %c0_24] : memref<8x4xf32, #tpu.memory_space<vmem>>, vector<8x4xf32>
    %cst_25 = arith.constant dense<0.000000e+00> : vector<8x16xf32>
    %35 = tpu.matmul %34, %1, %cst_25 {dimension_numbers = #tpu.dot_dimension_numbers<[1], [0], [0], [1], [0, 0, 1, 1], [], []>} : vector<8x4xf32>, vector<4x16xf32>, vector<8x16xf32> -> vector<8x16xf32>
    %c0_26 = arith.constant 0 : index
    %c0_27 = arith.constant 0 : index
    %36 = vector.load %arg8[%c0_26, %c0_27] : memref<8x1xf32, #tpu.memory_space<vmem>>, vector<8x1xf32>
    %37 = vector.broadcast %36 : vector<8x1xf32> to vector<8x16xf32>
    %38 = arith.addf %35, %37 : vector<8x16xf32>
    %39 = arith.addf %33, %38 : vector<8x16xf32>
    %cst_28 = arith.constant 0.000000e+00 : f32
    %40 = vector.broadcast %cst_28 : f32 to vector<8x16xf32>
    %41 = arith.maximumf %39, %40 : vector<8x16xf32>
    %c0_29 = arith.constant 0 : index
    %c0_30 = arith.constant 0 : index
    %c0_31 = arith.constant 0 : index
    %42 = vector.load %arg9[%c0_29, %c0_30, %c0_31] : memref<1x8x16xf32, #tpu.memory_space<vmem>>, vector<1x8x16xf32>
    %43 = vector.shape_cast %42 : vector<1x8x16xf32> to vector<8x16xf32>
    %44 = vector.shape_cast %41 : vector<8x16xf32> to vector<1x8x16xf32>
    tpu.vector_store %arg9[%c0_29, %c0_30, %c0_31], %44 {strides = array<i32>} : memref<1x8x16xf32, #tpu.memory_space<vmem>>, vector<1x8x16xf32>,
    return
  }
  func.func @transform_0(%arg0: i32, %arg1: i32) -> (i32, i32, i32) {
    %c0_i32 = arith.constant 0 : i32
    %c0_i32_0 = arith.constant 0 : i32
    return %arg0, %c0_i32, %arg1 : i32, i32, i32
  }
  func.func @transform_1(%arg0: i32, %arg1: i32) -> (i32, i32) {
    %c0_i32 = arith.constant 0 : i32
    %c0_i32_0 = arith.constant 0 : i32
    %c0_i32_1 = arith.constant 0 : i32
    return %c0_i32, %c0_i32_0 : i32, i32
  }
  func.func @transform_2(%arg0: i32, %arg1: i32) -> (i32, i32) {
    %c0_i32 = arith.constant 0 : i32
    %c0_i32_0 = arith.constant 0 : i32
    %c0_i32_1 = arith.constant 0 : i32
    return %c0_i32, %c0_i32_0 : i32, i32
  }
  func.func @transform_3(%arg0: i32, %arg1: i32) -> (i32, i32) {
    %c0_i32 = arith.constant 0 : i32
    %c0_i32_0 = arith.constant 0 : i32
    %c0_i32_1 = arith.constant 0 : i32
    return %c0_i32, %c0_i32_0 : i32, i32
  }
  func.func @transform_4(%arg0: i32, %arg1: i32) -> (i32, i32) {
    %c0_i32 = arith.constant 0 : i32
    %c0_i32_0 = arith.constant 0 : i32
    %c0_i32_1 = arith.constant 0 : i32
    return %c0_i32, %c0_i32_0 : i32, i32
  }
  func.func @transform_5(%arg0: i32, %arg1: i32) -> (i32, i32) {
    %c0_i32 = arith.constant 0 : i32
    %c0_i32_0 = arith.constant 0 : i32
    %c0_i32_1 = arith.constant 0 : i32
    return %c0_i32, %c0_i32_0 : i32, i32
  }
  func.func @transform_6(%arg0: i32, %arg1: i32) -> (i32, i32) {
    %c0_i32 = arith.constant 0 : i32
    %c0_i32_0 = arith.constant 0 : i32
    %c0_i32_1 = arith.constant 0 : i32
    return %c0_i32, %c0_i32_0 : i32, i32
  }
  func.func @transform_7(%arg0: i32, %arg1: i32) -> (i32, i32, i32) {
    %c0_i32 = arith.constant 0 : i32
    %c0_i32_0 = arith.constant 0 : i32
    return %arg0, %c0_i32, %arg1 : i32, i32, i32
  }
}

</mosaic_0001>

<llo_original>
// kernel: tpu_custom_call.1
$region0: #{tpu_custom_call.1}
  #allocation0 [shape = 'u32[]', space=smem, size = 0x4, offset = 0x4, fixed_abs, tag = 'smem constant byte address 0x4 - core index']
  #allocation1 [shape = 'u32[72,128]{1,0:T(1,128)}', space=vmem, size = 0x9000, scoped, tag = 'internal scratch']
  #allocation2 [shape = 'f32[4,20]{1,0:T(4,128)}', space=vmem, size = 0x800, scoped, tag = 'scratch operand']
  #allocation3 [shape = 'f32[8,20]{1,0:T(8,128)}', space=vmem, size = 0x1000, scoped, tag = 'scratch operand']
  %s0 = inlined_call_operand.vmem [shape: f32[2,4,16], index: 0, kind: input, shape index: {}]
  %s1 = inlined_call_operand.vmem [shape: f32[8,12], index: 1, kind: input, shape index: {}]
  %s2 = inlined_call_operand.vmem [shape: f32[8,1], index: 2, kind: input, shape index: {}]
  %s3 = inlined_call_operand.vmem [shape: f32[8,24], index: 3, kind: input, shape index: {}]
  %s4 = inlined_call_operand.vmem [shape: f32[8,1], index: 4, kind: input, shape index: {}]
  %s5 = inlined_call_operand.vmem [shape: f32[8,4], index: 5, kind: input, shape index: {}]
  %s6 = inlined_call_operand.vmem [shape: f32[8,1], index: 6, kind: input, shape index: {}]
  %s7 = inlined_call_operand.hbm [shape: f32[2,8,16], index: 7, kind: output, shape index: {}]
  %s8 = sld [smem:[#allocation0]]
  $region69: #{tpu_custom_call.1} parent=0
    _
  %s10 = ssub.s32 1, %s8
  %s11 = scalar_select 0, %s10, %s8
  $region1: #{tpu_custom_call.1} parent=0
    #allocation4 [shape = 'u8[8192]{0}', space=vmem, size = 0x2000, scoped, tag = 'output window, operand 0']
    #allocation5 [shape = 's32[2]{0}', space=sflag, size = 0x8, scoped, tag = 'scoped memory for tpu_custom_call.1']
    %12 = vsyncpa [#allocation5], 0
    %s13 = scalar_lea.sflag [#allocation5], 1
    %14 = vsyncpa %s13, 0
    loop: start=0, step=1, limit=4
    $region2: #{tpu_custom_call.1} parent=1 // loop_pre_header
      _
    $region3: #{tpu_custom_call.1} parent=1 // loop_header
      %s16 = sphi 0, %s20
      %p17 = scmp.ge.s32.totalorder %s16, 4
      %s23 = sphi 0, %s35
      %s24 = sphi 0, %s31
      %s25 = sphi 0, %s23
      %s26 = sphi 0, %s24
      %s27 = sphi 0, %s25
      %s28 = sphi 0, %s26
      %s40 = sphi 0, %s42
      %s43 = sphi 0, %s40
      %s44 = sphi 0, %s43
      %s60 = sphi 0, %s44
      %s64 = sphi 0, %s64
      %s66 = sphi 0, %s64
      %s67 = sphi 0, %s66
      %s81 = sphi 0, %s67
      %s85 = sphi 0, %s85
      %s87 = sphi 0, %s85
      %s88 = sphi 0, %s87
      %s102 = sphi 0, %s88
      %s106 = sphi 0, %s106
      %s108 = sphi 0, %s106
      %s109 = sphi 0, %s108
      %s123 = sphi 0, %s109
      %s127 = sphi 0, %s127
      %s129 = sphi 0, %s127
      %s130 = sphi 0, %s129
      %s144 = sphi 0, %s130
      %s148 = sphi 0, %s148
      %s150 = sphi 0, %s148
      %s151 = sphi 0, %s150
      %s165 = sphi 0, %s151
      %s169 = sphi 0, %s169
      %s171 = sphi 0, %s169
      %s172 = sphi 0, %s171
      %s186 = sphi 0, %s172
      %s194 = sphi 0, %s196
      %s197 = sphi 0, %s194
      %s198 = sphi 0, %s197
      %s214 = sphi 0, %s198
    $region4: #{tpu_custom_call.1} parent=1 // loop_header_branch
      %19 = sbr.rel (%p17) target = $region8
    $region5: #{tpu_custom_call.1} parent=1 // loop_body
      %s21 = ssub.s32 %s16, 1
      %s22 = ssub.s32 %s16, 2
      %s29 = sadd.s32 1, %s24
      %p30 = scmp.ge.s32.totalorder %s29, 1
      %s31 = scalar_select %p30, 0, %s29
      %s32 = sadd.s32 1, %s23
      %s33 = scalar_select %p30, %s32, %s23
      %p34 = scmp.ge.s32.totalorder %s33, 2
      %s35 = scalar_select %p34, 0, %s33
      %s36 = ssub.s32 %s23, %s35
      %s37 = ssub.s32 %s24, %s31
      %s38 = sor.u32 %s36, %s37
      %p39 = scmp.eq.s32.totalorder %s38, 0
      %s41 = sadd.s32 %s40, 1
      %s42 = scalar_select %p39, %s40, %s41
      %p45 = pneg %p39
      %p46 = scmp.eq.s32.totalorder %s16, 1
      %p47 = por %p45, %p46
      %p48 = scmp.ne.s32.totalorder %s40, %s43
      %p49 = scmp.eq.s32.totalorder %s16, 0
      %p50 = por %p48, %p49
      %p51 = scmp.ne.s32.totalorder %s40, %s43
      %p52 = scmp.eq.s32.totalorder %s21, 1
      %p53 = por %p51, %p52
      %p54 = scmp.ne.s32.totalorder %s43, %s44
      %p55 = scmp.eq.s32.totalorder %s21, 0
      %p56 = por %p54, %p55
      %p57 = scmp.ne.s32.totalorder %s43, %s44
      %p58 = scmp.eq.s32.totalorder %s22, 1
      %p59 = por %p57, %p58
      %p61 = scmp.ne.s32.totalorder %s44, %s60
      %p62 = scmp.eq.s32.totalorder %s22, 0
      %p63 = por %p61, %p62
      %s65 = sadd.s32 %s64, 1
      %p68 = scmp.eq.s32.totalorder %s16, 1
      %p69 = scmp.ne.s32.totalorder %s64, %s66
      %p70 = scmp.eq.s32.totalorder %s16, 0
      %p71 = por %p69, %p70
      %p72 = scmp.ne.s32.totalorder %s64, %s66
      %p73 = scmp.eq.s32.totalorder %s21, 1
      %p74 = por %p72, %p73
      %p75 = scmp.ne.s32.totalorder %s66, %s67
      %p76 = scmp.eq.s32.totalorder %s21, 0
      %p77 = por %p75, %p76
      %p78 = scmp.ne.s32.totalorder %s66, %s67
      %p79 = scmp.eq.s32.totalorder %s22, 1
      %p80 = por %p78, %p79
      %p82 = scmp.ne.s32.totalorder %s67, %s81
      %p83 = scmp.eq.s32.totalorder %s22, 0
      %p84 = por %p82, %p83
      %s86 = sadd.s32 %s85, 1
      %p89 = scmp.eq.s32.totalorder %s16, 1
      %p90 = scmp.ne.s32.totalorder %s85, %s87
      %p91 = scmp.eq.s32.totalorder %s16, 0
      %p92 = por %p90, %p91
      %p93 = scmp.ne.s32.totalorder %s85, %s87
      %p94 = scmp.eq.s32.totalorder %s21, 1
      %p95 = por %p93, %p94
      %p96 = scmp.ne.s32.totalorder %s87, %s88
      %p97 = scmp.eq.s32.totalorder %s21, 0
      %p98 = por %p96, %p97
      %p99 = scmp.ne.s32.totalorder %s87, %s88
      %p100 = scmp.eq.s32.totalorder %s22, 1
      %p101 = por %p99, %p100
      %p103 = scmp.ne.s32.totalorder %s88, %s102
      %p104 = scmp.eq.s32.totalorder %s22, 0
      %p105 = por %p103, %p104
      %s107 = sadd.s32 %s106, 1
      %p110 = scmp.eq.s32.totalorder %s16, 1
      %p111 = scmp.ne.s32.totalorder %s106, %s108
      %p112 = scmp.eq.s32.totalorder %s16, 0
      %p113 = por %p111, %p112
      %p114 = scmp.ne.s32.totalorder %s106, %s108
      %p115 = scmp.eq.s32.totalorder %s21, 1
      %p116 = por %p114, %p115
      %p117 = scmp.ne.s32.totalorder %s108, %s109
      %p118 = scmp.eq.s32.totalorder %s21, 0
      %p119 = por %p117, %p118
      %p120 = scmp.ne.s32.totalorder %s108, %s109
      %p121 = scmp.eq.s32.totalorder %s22, 1
      %p122 = por %p120, %p121
      %p124 = scmp.ne.s32.totalorder %s109, %s123
      %p125 = scmp.eq.s32.totalorder %s22, 0
      %p126 = por %p124, %p125
      %s128 = sadd.s32 %s127, 1
      %p131 = scmp.eq.s32.totalorder %s16, 1
      %p132 = scmp.ne.s32.totalorder %s127, %s129
      %p133 = scmp.eq.s32.totalorder %s16, 0
      %p134 = por %p132, %p133
      %p135 = scmp.ne.s32.totalorder %s127, %s129
      %p136 = scmp.eq.s32.totalorder %s21, 1
      %p137 = por %p135, %p136
      %p138 = scmp.ne.s32.totalorder %s129, %s130
      %p139 = scmp.eq.s32.totalorder %s21, 0
      %p140 = por %p138, %p139
      %p141 = scmp.ne.s32.totalorder %s129, %s130
      %p142 = scmp.eq.s32.totalorder %s22, 1
      %p143 = por %p141, %p142
      %p145 = scmp.ne.s32.totalorder %s130, %s144
      %p146 = scmp.eq.s32.totalorder %s22, 0
      %p147 = por %p145, %p146
      %s149 = sadd.s32 %s148, 1
      %p152 = scmp.eq.s32.totalorder %s16, 1
      %p153 = scmp.ne.s32.totalorder %s148, %s150
      %p154 = scmp.eq.s32.totalorder %s16, 0
      %p155 = por %p153, %p154
      %p156 = scmp.ne.s32.totalorder %s148, %s150
      %p157 = scmp.eq.s32.totalorder %s21, 1
      %p158 = por %p156, %p157
      %p159 = scmp.ne.s32.totalorder %s150, %s151
      %p160 = scmp.eq.s32.totalorder %s21, 0
      %p161 = por %p159, %p160
      %p162 = scmp.ne.s32.totalorder %s150, %s151
      %p163 = scmp.eq.s32.totalorder %s22, 1
      %p164 = por %p162, %p163
      %p166 = scmp.ne.s32.totalorder %s151, %s165
      %p167 = scmp.eq.s32.totalorder %s22, 0
      %p168 = por %p166, %p167
      %s170 = sadd.s32 %s169, 1
      %p173 = scmp.eq.s32.totalorder %s16, 1
      %p174 = scmp.ne.s32.totalorder %s169, %s171
      %p175 = scmp.eq.s32.totalorder %s16, 0
      %p176 = por %p174, %p175
      %p177 = scmp.ne.s32.totalorder %s169, %s171
      %p178 = scmp.eq.s32.totalorder %s21, 1
      %p179 = por %p177, %p178
      %p180 = scmp.ne.s32.totalorder %s171, %s172
      %p181 = scmp.eq.s32.totalorder %s21, 0
      %p182 = por %p180, %p181
      %p183 = scmp.ne.s32.totalorder %s171, %s172
      %p184 = scmp.eq.s32.totalorder %s22, 1
      %p185 = por %p183, %p184
      %p187 = scmp.ne.s32.totalorder %s172, %s186
      %p188 = scmp.eq.s32.totalorder %s22, 0
      %p189 = por %p187, %p188
      %s190 = ssub.s32 %s23, %s35
      %s191 = ssub.s32 %s24, %s31
      %s192 = sor.u32 %s190, %s191
      %p193 = scmp.eq.s32.totalorder %s192, 0
      %s195 = sadd.s32 %s194, 1
      %s196 = scalar_select %p193, %s194, %s195
      %p199 = pneg %p193
      %p200 = scmp.eq.s32.totalorder %s16, 1
      %p201 = por %p199, %p200
      %p202 = scmp.ne.s32.totalorder %s194, %s197
      %p203 = scmp.eq.s32.totalorder %s16, 0
      %p204 = por %p202, %p203
      %p205 = scmp.ne.s32.totalorder %s194, %s197
      %p206 = scmp.eq.s32.totalorder %s21, 1
      %p207 = por %p205, %p206
      %p208 = scmp.ne.s32.totalorder %s197, %s198
      %p209 = scmp.eq.s32.totalorder %s21, 0
      %p210 = por %p208, %p209
      %p211 = scmp.ne.s32.totalorder %s197, %s198
      %p212 = scmp.eq.s32.totalorder %s22, 1
      %p213 = por %p211, %p212
      %p215 = scmp.ne.s32.totalorder %s198, %s214
      %p216 = scmp.eq.s32.totalorder %s22, 0
      %p217 = por %p215, %p216
      %p218 = scmp.le.s32.totalorder 1, %s16
      %p219 = scmp.lt.s32.totalorder %s16, 3
      %p220 = pnand %p218, %p219
      %p221 = pneg %p220
      // Predicated region
      $region9: #{tpu_custom_call.1} parent=5 // pred_check
        _
      $region10: #{tpu_custom_call.1} parent=5 // pred_check_branch
        %223 = sbr.rel (%p220) target = $region12
      $region11: #{tpu_custom_call.1} parent=5 // pred_region
        %s224 = ssub.s32 %s16, 1
        // Predicated region
        $region13: #{tpu_custom_call.1} parent=11 // pred_check
          %p225 = pneg %p77
        $region14: #{tpu_custom_call.1} parent=11 // pred_check_branch
          %227 = sbr.rel (%p225) target = $region16
        $region15: #{tpu_custom_call.1} parent=11 // pred_region
          _
        $region16: #{tpu_custom_call.1} parent=11 // pred_fallthru
          _
        // Predicated region
        $region17: #{tpu_custom_call.1} parent=11 // pred_check
          %p228 = pneg %p98
        $region18: #{tpu_custom_call.1} parent=11 // pred_check_branch
          %230 = sbr.rel (%p228) target = $region20
        $region19: #{tpu_custom_call.1} parent=11 // pred_region
          _
        $region20: #{tpu_custom_call.1} parent=11 // pred_fallthru
          _
        // Predicated region
        $region21: #{tpu_custom_call.1} parent=11 // pred_check
          %p231 = pneg %p119
        $region22: #{tpu_custom_call.1} parent=11 // pred_check_branch
          %233 = sbr.rel (%p231) target = $region24
        $region23: #{tpu_custom_call.1} parent=11 // pred_region
          _
        $region24: #{tpu_custom_call.1} parent=11 // pred_fallthru
          _
        // Predicated region
        $region25: #{tpu_custom_call.1} parent=11 // pred_check
          %p234 = pneg %p140
        $region26: #{tpu_custom_call.1} parent=11 // pred_check_branch
          %236 = sbr.rel (%p234) target = $region28
        $region27: #{tpu_custom_call.1} parent=11 // pred_region
          _
        $region28: #{tpu_custom_call.1} parent=11 // pred_fallthru
          _
        // Predicated region
        $region29: #{tpu_custom_call.1} parent=11 // pred_check
          %p237 = pneg %p161
        $region30: #{tpu_custom_call.1} parent=11 // pred_check_branch
          %239 = sbr.rel (%p237) target = $region32
        $region31: #{tpu_custom_call.1} parent=11 // pred_region
          _
        $region32: #{tpu_custom_call.1} parent=11 // pred_fallthru
          _
        // Predicated region
        $region33: #{tpu_custom_call.1} parent=11 // pred_check
          %p240 = pneg %p182
        $region34: #{tpu_custom_call.1} parent=11 // pred_check_branch
          %242 = sbr.rel (%p240) target = $region36
        $region35: #{tpu_custom_call.1} parent=11 // pred_region
          _
        $region36: #{tpu_custom_call.1} parent=11 // pred_fallthru
          _
      $region12: #{tpu_custom_call.1} parent=5 // pred_fallthru
        _
      %p243 = scmp.lt.s32.totalorder %s16, 2
      // Predicated region
      $region37: #{tpu_custom_call.1} parent=5 // pred_check
        %p244 = pneg %p243
      $region38: #{tpu_custom_call.1} parent=5 // pred_check_branch
        %246 = sbr.rel (%p244) target = $region40
      $region39: #{tpu_custom_call.1} parent=5 // pred_region
        // Predicated region
        $region41: #{tpu_custom_call.1} parent=39 // pred_check
          %p247 = pneg %p50
        $region42: #{tpu_custom_call.1} parent=39 // pred_check_branch
          %249 = sbr.rel (%p247) target = $region44
        $region43: #{tpu_custom_call.1} parent=39 // pred_region
          %p250 = scmp.lt.s32.totalorder %s23, 1
          %s251 = scalar_select %p250, %s23, 1
          %p252 = scmp.lt.s32.totalorder %s24, 0
          %s253 = scalar_select %p252, %s24, 0
          %s254 = sadd.s32 %s253, %s251
          %s255 = smul.addr %s254, 4
          %s256 = scalar_lea.vmem %s0, %s255
        $region44: #{tpu_custom_call.1} parent=39 // pred_fallthru
          _
      $region40: #{tpu_custom_call.1} parent=5 // pred_fallthru
        _
      %p257 = scmp.le.s32.totalorder 1, %s16
      %p258 = scmp.lt.s32.totalorder %s16, 3
      %p259 = pnand %p257, %p258
      %p260 = pneg %p259
      // Predicated region
      $region45: #{tpu_custom_call.1} parent=5 // pred_check
        _
      $region46: #{tpu_custom_call.1} parent=5 // pred_check_branch
        %262 = sbr.rel (%p259) target = $region48
      $region47: #{tpu_custom_call.1} parent=5 // pred_region
        %s263 = ssub.s32 %s16, 1
        %p264 = scmp.lt.s32.totalorder %s25, 1
        %s265 = scalar_select %p264, %s25, 1
        %p266 = scmp.lt.s32.totalorder %s26, 0
        %s267 = scalar_select %p266, %s26, 0
        %s268 = sadd.s32 %s267, %s265
        %s269 = smul.addr %s268, 4
        %s270 = scalar_lea.vmem %s0, %s269
        %p271 = pneg %p56
        %p272 = pneg %p53
        %p273 = pneg %p77
        %p274 = pneg %p74
        %p275 = pneg %p98
        %p276 = pneg %p95
        %p277 = pneg %p119
        %p278 = pneg %p116
        %p279 = pneg %p140
        %p280 = pneg %p137
        %p281 = pneg %p161
        %p282 = pneg %p158
        %p283 = pneg %p182
        %p284 = pneg %p179
        %p285 = pneg %p210
        %p286 = pneg %p207
        %s287 = sand.u32 %s197, 1
        %s288 = scalar_lea.sflag [#allocation5], %s287
        %s289 = sand.u32 %s197, 1
        %s290 = smul.addr %s289, 8
        %s291 = scalar_lea.vmem [#allocation4], %s290
        %p292 = scmp.lt.s32.totalorder %s25, 1
        %s293 = scalar_select %p292, %s25, 1
        %p294 = scmp.lt.s32.totalorder %s26, 0
        %s295 = scalar_select %p294, %s26, 0
        %s296 = sadd.s32 %s295, %s293
        %s297 = smul.addr %s296, 4
        %s298 = scalar_lea.vmem %s0, %s297
        %v299 = vld [vmem:[%s298] sm:$0xf]
        %p300 = scmp.eq.s32.totalorder %s26, 0
        // Predicated region
        $region49: #{tpu_custom_call.1} parent=47 // pred_check
          %p301 = pneg %p300
        $region50: #{tpu_custom_call.1} parent=47 // pred_check_branch
          %303 = sbr.rel (%p301) target = $region52
        $region51: #{tpu_custom_call.1} parent=47 // pred_region
          %vm304 = vcmask 27648
          %305 = vst.msk [vmem:[#allocation2] sm:$0xf] %vm304, 0.0
          %vm306 = vcmask 31744
          %307 = vst.msk [vmem:[#allocation3] sm:$0xff] %vm306, 0.0
        $region52: #{tpu_custom_call.1} parent=47 // pred_fallthru
          _
        %p308 = scmp.gt.s32.totalorder %s26, 0
        // Predicated region
        $region53: #{tpu_custom_call.1} parent=47 // pred_check
          %p309 = pneg %p308
        $region54: #{tpu_custom_call.1} parent=47 // pred_check_branch
          %311 = sbr.rel (%p309) target = $region56
        $region55: #{tpu_custom_call.1} parent=47 // pred_region
          %v312 = vld [vmem:[#allocation2] sm:$0xf]
          %314 = vrot.lane.b32.xlu0 %v312, 112
          %v315 = vpop.permute.xlu0 %314
          %vm317 = vcmask 27648
          %318 = vst.msk [vmem:[#allocation2] sm:$0xf] %vm317, %v315
          %v319 = vld [vmem:[#allocation3] sm:$0xff]
          %321 = vrot.lane.b32.xlu0 %v319, 112
          %v322 = vpop.permute.xlu0 %321
          %vm324 = vcmask 31744
          %325 = vst.msk [vmem:[#allocation3] sm:$0xff] %vm324, %v322
        $region56: #{tpu_custom_call.1} parent=47 // pred_fallthru
          _
        %327 = vrot.lane.b32.xlu0 %v299, 4
        %v328 = vpop.permute.xlu0 %327
        %vm330 = vcmask 158752
        %331 = vst.msk [vmem:[#allocation2] sm:$0xf] %vm330, %v328
        %v332 = vld [vmem:[#allocation2] sm:$0xf]
        %v334 = vrot.slane %v332, 4
        %335 = vrot.lane.b32.xlu0 %v334, 126
        %v336 = vpop.permute.xlu0 %335
        %338 = vrot.lane.b32.xlu0 %v332, 124
        %v339 = vpop.permute.xlu0 %338
        %vm340 = vcmask 1043456
        %v341 = vsel %vm340, %v332, %v336
        %v342 = vld [vmem:[%s1] sm:$0xff]
        %v343 = vld [vmem:[%s2] sm:$0xff]
        %345 = vset.pattern.permute.xlu0 0
        %346 = vperm.xlu0 %345, %v343
        %v347 = vpop.permute.xlu0 %346
        %vm349 = vcmask 97280
        %v351 = vsel %vm349, %v342, 0
        %v353 = vsel %vm340, %v339, 0
        %355 = vmatpush.msra.mxu0 0.0
        %356 = vmatpush.msra.mxu0 0.0
        %357 = vmatpush.msra.mxu0 0.0
        %358 = vmatpush.msra.mxu0 0.0
        %359 = vmatpush.msra.mxu0 0.0
        %360 = vmatpush.msra.mxu0 0.0
        %361 = vmatpush.msra.mxu0 0.0
        %362 = vmatpush.msra.mxu0 0.0
        %363 = vmatpush.msra.mxu0 0.0
        %364 = vmatpush.msra.mxu0 0.0
        %365 = vmatpush.msra.mxu0 0.0
        %366 = vmatpush.msra.mxu0 0.0
        %367 = vmatpush.msra.mxu0 0.0
        %368 = vmatpush.msra.mxu0 0.0
        %369 = vmatpush.msra.mxu0 %v353
        %370 = vmatpush.msra.mxu0 %v341
        %371 = vmatmul.f32.gmra.mxu0 %v351
        %v372 = vpop.f32.mrf.mxu0
        %v373 = vadd.f32 %v347, %v372
        %374 = vdwg.mxu0
        %v375 = vmax.f32 %v373, 0.0
        %377 = vrot.lane.b32.xlu0 %v375, 4
        %v378 = vpop.permute.xlu0 %377
        %vm380 = vcmask 162848
        %381 = vst.msk [vmem:[#allocation3] sm:$0xff] %vm380, %v378
        %v382 = vld [vmem:[#allocation3] sm:$0xff]
        %384 = vrot.lane.b32.xlu0 %v382, 126
        %v385 = vpop.permute.xlu0 %384
        %387 = vrot.lane.b32.xlu0 %v382, 124
        %v388 = vpop.permute.xlu0 %387
        %v390 = vld [vmem:[%s3] sm:$0xff]
        %v391 = vld [vmem:[%s4] sm:$0xff]
        %393 = vset.pattern.permute.xlu0 0
        %394 = vperm.xlu0 %393, %v391
        %v395 = vpop.permute.xlu0 %394
        %vm397 = vcmask 195584
        %v399 = vsel %vm397, %v390, 0
        %401 = vmatpush.msra.mxu0 0.0
        %402 = vmatpush.msra.mxu0 0.0
        %403 = vmatpush.msra.mxu0 0.0
        %404 = vmatpush.msra.mxu0 0.0
        %405 = vmatpush.msra.mxu0 0.0
        %406 = vmatpush.msra.mxu0 0.0
        %407 = vmatpush.msra.mxu0 0.0
        %408 = vmatpush.msra.mxu0 0.0
        %409 = vmatpush.msra.mxu0 0.0
        %410 = vmatpush.msra.mxu0 0.0
        %411 = vmatpush.msra.mxu0 0.0
        %412 = vmatpush.msra.mxu0 0.0
        %413 = vmatpush.msra.mxu0 0.0
        %414 = vmatpush.msra.mxu0 %v388
        %415 = vmatpush.msra.mxu0 %v385
        %416 = vmatpush.msra.mxu0 %v382
        %417 = vmatmul.f32.gmra.mxu0 %v399
        %v418 = vpop.f32.mrf.mxu0
        %v419 = vadd.f32 %v395, %v418
        %420 = vdwg.mxu0
        %v421 = vmax.f32 %v419, 0.0
        %v422 = vld [vmem:[%s5] sm:$0xff]
        %v423 = vld [vmem:[%s6] sm:$0xff]
        %425 = vset.pattern.permute.xlu0 0
        %426 = vperm.xlu0 %425, %v423
        %v427 = vpop.permute.xlu0 %426
        %vm429 = vcmask 31744
        %v431 = vsel %vm429, %v422, 0
        %v433 = vsel %vm340, %v299, 0
        %435 = vmatpush.msra.mxu0 0.0
        %436 = vmatpush.msra.mxu0 0.0
        %437 = vmatpush.msra.mxu0 0.0
        %438 = vmatpush.msra.mxu0 0.0
        %439 = vmatpush.msra.mxu0 0.0
        %440 = vmatpush.msra.mxu0 0.0
        %441 = vmatpush.msra.mxu0 0.0
        %442 = vmatpush.msra.mxu0 0.0
        %443 = vmatpush.msra.mxu0 0.0
        %444 = vmatpush.msra.mxu0 0.0
        %445 = vmatpush.msra.mxu0 0.0
        %446 = vmatpush.msra.mxu0 0.0
        %447 = vmatpush.msra.mxu0 0.0
        %448 = vmatpush.msra.mxu0 0.0
        %449 = vmatpush.msra.mxu0 0.0
        %450 = vmatpush.msra.mxu0 %v433
        %451 = vmatmul.f32.gmra.mxu0 %v431
        %v452 = vpop.f32.mrf.mxu0
        %v453 = vadd.f32 %v427, %v452
        %454 = vdwg.mxu0
        %v455 = vadd.f32 %v421, %v453
        %v456 = vmax.f32 %v455, 0.0
        %vm457 = vcmask 130048
        %458 = vst.msk [vmem:[%s291] sm:$0xff] %vm457, %v456
        %s459 = sand.u32 %s197, 1
        %s460 = scalar_lea.sflag [#allocation5], %s459
        %s461 = sand.u32 %s197, 1
        %s462 = smul.addr %s461, 8
        %s463 = scalar_lea.vmem [#allocation4], %s462
        // Predicated region
        $region57: #{tpu_custom_call.1} parent=47 // pred_check
          %p464 = pneg %p207
        $region58: #{tpu_custom_call.1} parent=47 // pred_check_branch
          %466 = sbr.rel (%p464) target = $region60
        $region59: #{tpu_custom_call.1} parent=47 // pred_region
          %468 = vsyncadd %s460, 0
          %s469 = sadd.s32 %s26, %s25
          %s470 = smul.addr %s469, 8
          %s471 = scalar_lea.hbm %s7, %s470
          %s473 = sshll.u32 %s463, 4
          %s474 = int_to_ptr.vmem [resolvable:$true] %s473
          %s475 = sshll.u32 %s471, 4
          %s476 = int_to_ptr.hbm [resolvable:$true] %s475
          %478 = dma.vmem_to_hbm [thread:$0]  %s474, 128, %s476, %s460
        $region60: #{tpu_custom_call.1} parent=47 // pred_fallthru
          _
      $region48: #{tpu_custom_call.1} parent=5 // pred_fallthru
        _
      %p479 = scmp.le.s32.totalorder 2, %s16
      // Predicated region
      $region61: #{tpu_custom_call.1} parent=5 // pred_check
        %p480 = pneg %p479
      $region62: #{tpu_custom_call.1} parent=5 // pred_check_branch
        %482 = sbr.rel (%p480) target = $region64
      $region63: #{tpu_custom_call.1} parent=5 // pred_region
        %s483 = ssub.s32 %s16, 2
        // Predicated region
        $region65: #{tpu_custom_call.1} parent=63 // pred_check
          %p484 = pneg %p213
        $region66: #{tpu_custom_call.1} parent=63 // pred_check_branch
          %486 = sbr.rel (%p484) target = $region68
        $region67: #{tpu_custom_call.1} parent=63 // pred_region
          %s487 = sand.u32 %s198, 1
          %s488 = scalar_lea.sflag [#allocation5], %s487
          %s489 = sand.u32 %s198, 1
          %s490 = smul.addr %s489, 8
          %s491 = scalar_lea.vmem [#allocation4], %s490
          %493 = dma.done %s488, 128
        $region68: #{tpu_custom_call.1} parent=63 // pred_fallthru
          _
      $region64: #{tpu_custom_call.1} parent=5 // pred_fallthru
        _
    $region6: #{tpu_custom_call.1} parent=1 // loop_footer
      %s20 = sadd.s32 1, %s16
    $region7: #{tpu_custom_call.1} parent=1 // loop_footer_branch
      %15 = sbr.rel target = $region3
    $region8: #{tpu_custom_call.1} parent=1 // loop_exit
      _
    %494 = vsyncpa [#allocation5], 1
    %s495 = scalar_lea.sflag [#allocation5], 1
    %496 = vsyncpa %s495, 1

</llo_original>
